<compile_context>
chip_gen: v5e
topology: v5e:2x2
jax: 0.10.0
libtpu: 0.0.40
codegen_flags: <defaults>
</compile_context>

<pallas_src>
from functools import partial

import jax
import jax.numpy as jnp
from jax import lax
from jax.experimental import pallas as pl
from jax.experimental.pallas import tpu as pltpu

NEG_SLOPE = 0.01  # torch.nn.LeakyReLU default negative_slope


def _leaky_relu(x):
    return jnp.where(x > 0, x, NEG_SLOPE * x)


def _round_up(a, b):
    return -(-a // b) * b


def _dilated_taps_mm(w, slicer, *, K, dilation, n_ch, out_len):
    """Dilated causal conv as MXU matmul(s).

    w is (Cout, K*n_ch) bf16 with the K taps stacked along the contraction
    axis; slicer(off, n) returns a bf16 (n_ch, n) operand shifted by `off`
    columns.  For tiny bf16-sublane-aligned channel counts the K shifted
    operands are concatenated so the MXU sees one deep contraction; otherwise
    K unrolled tap matmuls are issued (preferred on v7x where the MRB
    accumulates in place, and on v5e where the concat's vector stores would
    pressure the single vst slot).  Accumulation is always f32.
    """
    if n_ch % 16 == 0 and n_ch < 128:
        stacked = jnp.concatenate(
            [slicer(k * dilation, out_len) for k in range(K)], axis=0)
        return jnp.dot(w, stacked, preferred_element_type=jnp.float32)
    acc = None
    for k in range(K):                       # static unroll, K is small
        part = jnp.dot(w[:, k * n_ch:(k + 1) * n_ch],
                       slicer(k * dilation, out_len),
                       preferred_element_type=jnp.float32)
        acc = part if acc is None else acc + part
    return acc


def temp_block_kernel(x_ref, halo_ref, w1_ref, b1_ref, w2_ref, b2_ref, *rest,
                      K, dilation, pad, Lt, HALO, res_conv):
    """One (batch, L-tile) grid step.

    x_ref    : (1, Cin, Lt)   f32  auto-pipelined bulk tile of x
    halo_ref : (1, Cin, HALO) f32  auto-pipelined tile ending at this tile's
                                   start (HALO = round_up(2*pad, 128)); only
                                   its last 2*pad columns are consumed.
    w1_ref   : (Cout, K*Cin)  bf16 conv1 taps stacked along contraction
    w2_ref   : (Cout, K*Cout) bf16 conv2 taps stacked along contraction
    b*_ref   : (Cout, 1)      f32  biases (broadcast along lanes)
    rest     : (wr_ref, br_ref, out_ref) when res_conv else (out_ref,)
    out_ref  : (1, Cout, Lt)  lane-dense output tile
    """
    if res_conv:
        wr_ref, br_ref, out_ref = rest
    else:
        (out_ref,) = rest

    lt = pl.program_id(1)
    t0 = lt * Lt                                   # first output column
    cin = x_ref.shape[1]
    cout = w2_ref.shape[0]

    x_bulk = x_ref[0]                              # (Cin, Lt) f32
    halo = halo_ref[0]                             # (Cin, HALO) f32

    # Conv1's causal zero padding: window positions (t0 - HALO + j) < 0 must
    # read as zero.  Only the first tile is affected (for lt >= 1 the halo
    # block is real data and the mask is a no-op); kept unconditional because
    # the compare+select over a (Cin, HALO) slab is negligible VPU work.
    col = lax.broadcasted_iota(jnp.int32, (1, HALO), 1)
    halo = jnp.where(t0 - HALO + col >= 0, halo, 0.0)

    # Assemble the bf16 window for the MXU: [HALO halo cols | Lt bulk cols].
    # The bulk lands at a lane-aligned column (HALO % 128 == 0).
    win = jnp.concatenate(
        [halo.astype(jnp.bfloat16), x_bulk.astype(jnp.bfloat16)], axis=1)
    base = HALO - 2 * pad                          # static, first column read

    # ---- conv1 (dilated causal) + bias + LeakyReLU over the extended range
    # [t0 - pad, t0 + Lt): h1 carries a pad-column left halo for conv2.
    acc1 = _dilated_taps_mm(
        w1_ref[...], lambda off, n: win[:, base + off:base + off + n],
        K=K, dilation=dilation, n_ch=cin, out_len=Lt + pad)
    h1 = _leaky_relu(acc1 + b1_ref[...])           # (Cout, Lt+pad) f32

    # conv2's causal padding zero-pads h1, so positions < 0 must be 0 (not
    # LeakyReLU(b1)).  Only tiles with t0 < pad are affected; cheap VPU.
    col2 = lax.broadcasted_iota(jnp.int32, (1, Lt + pad), 1)
    h1 = jnp.where(t0 - pad + col2 >= 0, h1, 0.0)
    h1b = h1.astype(jnp.bfloat16)

    # ---- conv2 (dilated causal) + bias over the Lt-column tile
    acc2 = _dilated_taps_mm(
        w2_ref[...], lambda off, n: h1b[:, off:off + n],
        K=K, dilation=dilation, n_ch=cout, out_len=Lt)
    h2 = acc2 + b2_ref[...]                        # (Cout, Lt) f32

    # ---- residual: 1x1 conv when Cin != Cout, otherwise exact f32 identity
    if res_conv:
        res = jnp.dot(wr_ref[...], x_bulk.astype(jnp.bfloat16),
                      preferred_element_type=jnp.float32) + br_ref[...]
    else:
        res = x_bulk                               # identity, stays f32

    out_ref[0] = _leaky_relu(h2 + res).astype(out_ref.dtype)


def temp_block(x, params, *, kernel_size, dilation, lt_target=1024,
               out_dtype=None, vmem_limit_mb=48):
    """x: (N, Cin, L) float32 (PyTorch NCL).  Returns (N, Cout, L)."""
    N, Cin, L = x.shape
    K = kernel_size
    Cout = params["w1"].shape[2]
    pad = (K - 1) * dilation                 # standard TCN causal padding
    out_dtype = x.dtype if out_dtype is None else out_dtype

    # ---- length tiling ------------------------------------------------------
    # HALO = lane-aligned causal halo width; Lt is a multiple of HALO (hence
    # of 128) so the output tile is always lane-dense and the halo BlockSpec
    # can address the block immediately left of the tile.
    HALO = max(128, _round_up(2 * pad, 128))
    Lt = max(HALO, (max(lt_target, HALO) // HALO) * HALO)
    Lt = min(Lt, _round_up(L, HALO))
    if N == 1 and _round_up(L, HALO) >= 2 * HALO:
        # batch of 1: split L into >= 2 parallel tiles so both v7x TCs work.
        Lt = min(Lt, _round_up(_round_up(L, HALO) // 2, HALO))
    num_lt = -(-L // Lt)
    L_round = num_lt * Lt
    # v6e (128 MiB VMEM): lt_target up to 2048-4096 is safe; v7x (64 MiB):
    # keep the default and vmem_limit <= ~48 MiB.

    # Right-pad only when L is ragged w.r.t. the tile (f32, no dtype change).
    # Producers with 128-aligned L skip this pass entirely.
    x_in = x if L_round == L else jnp.pad(x, ((0, 0), (0, 0), (0, L_round - L)))

    # ---- weights: K taps stacked along the contraction axis (bf16) ----------
    w1s = jnp.transpose(params["w1"], (2, 0, 1)).reshape(Cout, K * Cin)
    w2s = jnp.transpose(params["w2"], (2, 0, 1)).reshape(Cout, K * Cout)
    w1s = w1s.astype(jnp.bfloat16)
    w2s = w2s.astype(jnp.bfloat16)
    b1c = jnp.transpose(params["b1"], (1, 0)).astype(jnp.float32)
    b2c = jnp.transpose(params["b2"], (1, 0)).astype(jnp.float32)
    res_conv = "wr" in params
    if not res_conv:
        assert Cin == Cout, "identity residual requires n_inputs == n_outputs"

    kernel = partial(temp_block_kernel, K=K, dilation=dilation, pad=pad,
                     Lt=Lt, HALO=HALO, res_conv=res_conv)

    blocks_per_tile = Lt // HALO
    in_specs = [
        # bulk x tile (auto-pipelined / double-buffered by Pallas)
        pl.BlockSpec((1, Cin, Lt), lambda b, l: (b, 0, l)),
        # halo: the HALO-wide block ending where this tile starts (clamped to
        # block 0 for the first tile, whose halo is zero-masked in-kernel)
        pl.BlockSpec((1, Cin, HALO),
                     lambda b, l: (b, 0, jnp.maximum(l * blocks_per_tile - 1, 0))),
        pl.BlockSpec((Cout, K * Cin), lambda b, l: (0, 0)),
        pl.BlockSpec((Cout, 1), lambda b, l: (0, 0)),
        pl.BlockSpec((Cout, K * Cout), lambda b, l: (0, 0)),
        pl.BlockSpec((Cout, 1), lambda b, l: (0, 0)),
    ]
    args = [x_in, x_in, w1s, b1c, w2s, b2c]
    if res_conv:
        wrt = jnp.transpose(params["wr"], (1, 0)).astype(jnp.bfloat16)
        brc = jnp.transpose(params["br"], (1, 0)).astype(jnp.float32)
        in_specs += [pl.BlockSpec((Cout, Cin), lambda b, l: (0, 0)),
                     pl.BlockSpec((Cout, 1), lambda b, l: (0, 0))]
        args += [wrt, brc]

    out = pl.pallas_call(
        kernel,
        out_shape=jax.ShapeDtypeStruct((N, Cout, L_round), out_dtype),
        grid_spec=pltpu.PrefetchScalarGridSpec(
            num_scalar_prefetch=0,
            grid=(N, num_lt),
            in_specs=in_specs,
            out_specs=pl.BlockSpec((1, Cout, Lt), lambda b, l: (b, 0, l)),
        ),
        compiler_params=pltpu.CompilerParams(
            dimension_semantics=("parallel", "parallel"),
            vmem_limit_bytes=vmem_limit_mb * 1024 * 1024,
        ),
    )(*args)

    return out if L_round == L else out[:, :, :L]


# ---------------------------- reference (pure JAX) ---------------------------
def _conv1d_ref(x, w_oik, b, *, pad, dilation):
    # x: (N, Cin, L), w_oik: (Cout, Cin, K)  — matches torch.nn.Conv1d
    y = lax.conv_general_dilated(
        x, w_oik, window_strides=(1,), padding=[(pad, pad)],
        rhs_dilation=(dilation,),
        dimension_numbers=("NCH", "OIH", "NCH"))
    return y + b[None, :, None]


def temp_block_ref(x, params, *, kernel_size, dilation):
    """Pure-JAX reference mirroring the kernel's bf16 MXU operands (conv
    inputs / weights / inter-conv activation) with f32 accumulation and f32
    elementwise math, so the comparison isolates logic errors from expected
    bf16 quantization."""
    r = lambda a: a.astype(jnp.bfloat16).astype(jnp.float32)
    pad = (kernel_size - 1) * dilation
    x_r = r(x)
    w1 = jnp.transpose(r(params["w1"]), (2, 1, 0))   # (K,Cin,Cout)->(Cout,Cin,K)
    w2 = jnp.transpose(r(params["w2"]), (2, 1, 0))
    h = _conv1d_ref(x_r, w1, params["b1"][0], pad=pad, dilation=dilation)
    if pad > 0:
        h = h[:, :, :-pad]                           # Chomp
    h = _leaky_relu(h)
    h = r(h)                                         # kernel feeds conv2 in bf16
    h = _conv1d_ref(h, w2, params["b2"][0], pad=pad, dilation=dilation)
    if pad > 0:
        h = h[:, :, :-pad]                           # Chomp
    if "wr" in params:
        res = (jnp.einsum("ncl,co->nol", x_r, r(params["wr"]))
               + params["br"][0][None, :, None])
    else:
        res = x                                      # kernel identity path is f32
    return _leaky_relu(h + res)


if __name__ == "__main__":
    key = jax.random.PRNGKey(0)

    def make_case(k, N, Cin, Cout, L, K, residual_conv):
        ks = jax.random.split(k, 7)
        x = jax.random.normal(ks[0], (N, Cin, L), jnp.float32)
        params = {
            "w1": 0.2 * jax.random.normal(ks[1], (K, Cin, Cout), jnp.float32),
            "b1": 0.1 * jax.random.normal(ks[2], (1, Cout), jnp.float32),
            "w2": 0.2 * jax.random.normal(ks[3], (K, Cout, Cout), jnp.float32),
            "b2": 0.1 * jax.random.normal(ks[4], (1, Cout), jnp.float32),
        }
        if residual_conv:
            params["wr"] = 0.2 * jax.random.normal(ks[5], (Cin, Cout), jnp.float32)
            params["br"] = 0.1 * jax.random.normal(ks[6], (1, Cout), jnp.float32)
        return x, params

    k1, k2 = jax.random.split(key)

    # Case 1: module-spec shapes (n_inputs != n_outputs -> 1x1-conv residual),
    # single lane-aligned L tile (L=16 right-padded to 128), unrolled MXU path.
    x1, p1 = make_case(k1, N=2, Cin=4, Cout=8, L=16, K=3, residual_conv=True)
    out1 = jax.block_until_ready(temp_block(x1, p1, kernel_size=3, dilation=2))
    ref1 = temp_block_ref(x1, p1, kernel_size=3, dilation=2)
    assert out1.shape == (2, 8, 16), out1.shape
    assert jnp.allclose(out1, ref1, rtol=2e-3, atol=2e-3), \
        float(jnp.max(jnp.abs(out1 - ref1)))

    # Case 2: n_inputs == n_outputs (exact f32 identity residual), batch of 1
    # split into two 128-column tiles (exercises the shifted-halo BlockSpec
    # across tiles and the v7x two-tile split) and the stacked-taps MXU path.
    x2, p2 = make_case(k2, N=1, Cin=16, Cout=16, L=256, K=3, residual_conv=False)
    out2 = jax.block_until_ready(temp_block(x2, p2, kernel_size=3, dilation=2))
    ref2 = temp_block_ref(x2, p2, kernel_size=3, dilation=2)
    assert out2.shape == (1, 16, 256), out2.shape
    assert jnp.allclose(out2, ref2, rtol=2e-3, atol=2e-3), \
        float(jnp.max(jnp.abs(out2 - ref2)))

    print("KERNEL_OK")
</pallas_src>

<mosaic_0001>
module attributes {stable_mosaic.version = 11 : i64} {
  func.func @temp_block_kernel(%arg0: i32, %arg1: i32, %arg2: memref<1x4x128xf32, #tpu.memory_space<vmem>>, %arg3: memref<1x4x128xf32, #tpu.memory_space<vmem>>, %arg4: memref<8x12xbf16, #tpu.memory_space<vmem>>, %arg5: memref<8x1xf32, #tpu.memory_space<vmem>>, %arg6: memref<8x24xbf16, #tpu.memory_space<vmem>>, %arg7: memref<8x1xf32, #tpu.memory_space<vmem>>, %arg8: memref<8x4xbf16, #tpu.memory_space<vmem>>, %arg9: memref<8x1xf32, #tpu.memory_space<vmem>>, %arg10: memref<1x8x128xf32, #tpu.memory_space<vmem>>) attributes {dimension_semantics = [#tpu.dimension_semantics<parallel>, #tpu.dimension_semantics<parallel>], iteration_bounds = array<i64: 2, 1>, scalar_prefetch = 0 : i64, scratch_operands = 0 : i64, tpu.core_type = #tpu.core_type<tc>, window_params = [{transform_indices = @transform_0, window_bounds = array<i64: 1, 4, 128>}, {transform_indices = @transform_1, window_bounds = array<i64: 1, 4, 128>}, {pipeline_mode = #tpu.pipeline_mode<synchronous>, transform_indices = @transform_2, window_bounds = array<i64: 8, 12>}, {pipeline_mode = #tpu.pipeline_mode<synchronous>, transform_indices = @transform_3, window_bounds = array<i64: 8, 1>}, {pipeline_mode = #tpu.pipeline_mode<synchronous>, transform_indices = @transform_4, window_bounds = array<i64: 8, 24>}, {pipeline_mode = #tpu.pipeline_mode<synchronous>, transform_indices = @transform_5, window_bounds = array<i64: 8, 1>}, {pipeline_mode = #tpu.pipeline_mode<synchronous>, transform_indices = @transform_6, window_bounds = array<i64: 8, 4>}, {pipeline_mode = #tpu.pipeline_mode<synchronous>, transform_indices = @transform_7, window_bounds = array<i64: 8, 1>}, {transform_indices = @transform_8, window_bounds = array<i64: 1, 8, 128>}]} {
    %c128_i32 = arith.constant 128 : i32
    %0 = arith.muli %arg1, %c128_i32 : i32
    %c0 = arith.constant 0 : index
    %c0_0 = arith.constant 0 : index
    %c0_1 = arith.constant 0 : index
    %1 = vector.load %arg2[%c0, %c0_0, %c0_1] : memref<1x4x128xf32, #tpu.memory_space<vmem>>, vector<1x4x128xf32>
    %2 = vector.shape_cast %1 : vector<1x4x128xf32> to vector<4x128xf32>
    %c0_2 = arith.constant 0 : index
    %c0_3 = arith.constant 0 : index
    %c0_4 = arith.constant 0 : index
    %3 = vector.load %arg3[%c0_2, %c0_3, %c0_4] : memref<1x4x128xf32, #tpu.memory_space<vmem>>, vector<1x4x128xf32>
    %4 = vector.shape_cast %3 : vector<1x4x128xf32> to vector<4x128xf32>
    %5 = tpu.iota {dimensions = array<i32: 1>} : vector<1x128xi32>
    %c128_i32_5 = arith.constant 128 : i32
    %6 = arith.subi %0, %c128_i32_5 : i32
    %7 = vector.broadcast %6 : i32 to vector<1x128xi32>
    %8 = arith.addi %7, %5 : vector<1x128xi32>
    %c0_i32 = arith.constant 0 : i32
    %9 = vector.broadcast %c0_i32 : i32 to vector<1x128xi32>
    %10 = arith.cmpi sge, %8, %9 : vector<1x128xi32>
    %cst = arith.constant 0.000000e+00 : f32
    %11 = vector.shape_cast %10 : vector<1x128xi1> to vector<1x128xi1>
    %12 = vector.broadcast %11 : vector<1x128xi1> to vector<4x128xi1>
    %13 = vector.broadcast %cst : f32 to vector<4x128xf32>
    %14 = arith.select %12, %4, %13 : vector<4x128xi1>, vector<4x128xf32>
    %15 = arith.truncf %14 : vector<4x128xf32> to vector<4x128xbf16>
    %16 = arith.truncf %2 : vector<4x128xf32> to vector<4x128xbf16>
    %17 = tpu.concatenate %15, %16 in 1 : vector<4x128xbf16>, vector<4x128xbf16> -> vector<4x256xbf16>
    %c0_6 = arith.constant 0 : index
    %c0_7 = arith.constant 0 : index
    %18 = vector.load %arg4[%c0_6, %c0_7] : memref<8x12xbf16, #tpu.memory_space<vmem>>, vector<8x12xbf16>
    %19 = vector.extract_strided_slice %18 {offsets = [0, 0], sizes = [8, 4], strides = [1, 1]} : vector<8x12xbf16> to vector<8x4xbf16>
    %20 = vector.extract_strided_slice %17 {offsets = [0, 120], sizes = [4, 132], strides = [1, 1]} : vector<4x256xbf16> to vector<4x132xbf16>
    %cst_8 = arith.constant dense<0.000000e+00> : vector<8x132xf32>
    %21 = tpu.matmul %19, %20, %cst_8 {dimension_numbers = #tpu.dot_dimension_numbers<[1], [0], [0], [1], [0, 0, 1, 1], [], []>} : vector<8x4xbf16>, vector<4x132xbf16>, vector<8x132xf32> -> vector<8x132xf32>
    %22 = vector.extract_strided_slice %18 {offsets = [0, 4], sizes = [8, 4], strides = [1, 1]} : vector<8x12xbf16> to vector<8x4xbf16>
    %23 = vector.extract_strided_slice %17 {offsets = [0, 122], sizes = [4, 132], strides = [1, 1]} : vector<4x256xbf16> to vector<4x132xbf16>
    %cst_9 = arith.constant dense<0.000000e+00> : vector<8x132xf32>
    %24 = tpu.matmul %22, %23, %cst_9 {dimension_numbers = #tpu.dot_dimension_numbers<[1], [0], [0], [1], [0, 0, 1, 1], [], []>} : vector<8x4xbf16>, vector<4x132xbf16>, vector<8x132xf32> -> vector<8x132xf32>
    %25 = arith.addf %21, %24 : vector<8x132xf32>
    %26 = vector.extract_strided_slice %18 {offsets = [0, 8], sizes = [8, 4], strides = [1, 1]} : vector<8x12xbf16> to vector<8x4xbf16>
    %27 = vector.extract_strided_slice %17 {offsets = [0, 124], sizes = [4, 132], strides = [1, 1]} : vector<4x256xbf16> to vector<4x132xbf16>
    %cst_10 = arith.constant dense<0.000000e+00> : vector<8x132xf32>
    %28 = tpu.matmul %26, %27, %cst_10 {dimension_numbers = #tpu.dot_dimension_numbers<[1], [0], [0], [1], [0, 0, 1, 1], [], []>} : vector<8x4xbf16>, vector<4x132xbf16>, vector<8x132xf32> -> vector<8x132xf32>
    %29 = arith.addf %25, %28 : vector<8x132xf32>
    %c0_11 = arith.constant 0 : index
    %c0_12 = arith.constant 0 : index
    %30 = vector.load %arg5[%c0_11, %c0_12] : memref<8x1xf32, #tpu.memory_space<vmem>>, vector<8x1xf32>
    %31 = vector.broadcast %30 : vector<8x1xf32> to vector<8x132xf32>
    %32 = arith.addf %29, %31 : vector<8x132xf32>
    %cst_13 = arith.constant 0.000000e+00 : f32
    %33 = vector.broadcast %cst_13 : f32 to vector<8x132xf32>
    %34 = arith.cmpf ogt, %32, %33 : vector<8x132xf32>
    %cst_14 = arith.constant 0.00999999977 : f32
    %35 = vector.broadcast %cst_14 : f32 to vector<8x132xf32>
    %36 = arith.mulf %35, %32 : vector<8x132xf32>
    %37 = arith.select %34, %32, %36 : vector<8x132xi1>, vector<8x132xf32>
    %38 = tpu.iota {dimensions = array<i32: 1>} : vector<1x132xi32>
    %c4_i32 = arith.constant 4 : i32
    %39 = arith.subi %0, %c4_i32 : i32
    %40 = vector.broadcast %39 : i32 to vector<1x132xi32>
    %41 = arith.addi %40, %38 : vector<1x132xi32>
    %c0_i32_15 = arith.constant 0 : i32
    %42 = vector.broadcast %c0_i32_15 : i32 to vector<1x132xi32>
    %43 = arith.cmpi sge, %41, %42 : vector<1x132xi32>
    %cst_16 = arith.constant 0.000000e+00 : f32
    %44 = vector.shape_cast %43 : vector<1x132xi1> to vector<1x132xi1>
    %45 = vector.broadcast %44 : vector<1x132xi1> to vector<8x132xi1>
    %46 = vector.broadcast %cst_16 : f32 to vector<8x132xf32>
    %47 = arith.select %45, %37, %46 : vector<8x132xi1>, vector<8x132xf32>
    %48 = arith.truncf %47 : vector<8x132xf32> to vector<8x132xbf16>
    %c0_17 = arith.constant 0 : index
    %c0_18 = arith.constant 0 : index
    %49 = vector.load %arg6[%c0_17, %c0_18] : memref<8x24xbf16, #tpu.memory_space<vmem>>, vector<8x24xbf16>
    %50 = vector.extract_strided_slice %49 {offsets = [0, 0], sizes = [8, 8], strides = [1, 1]} : vector<8x24xbf16> to vector<8x8xbf16>
    %51 = vector.extract_strided_slice %48 {offsets = [0, 0], sizes = [8, 128], strides = [1, 1]} : vector<8x132xbf16> to vector<8x128xbf16>
    %cst_19 = arith.constant dense<0.000000e+00> : vector<8x128xf32>
    %52 = tpu.matmul %50, %51, %cst_19 {dimension_numbers = #tpu.dot_dimension_numbers<[1], [0], [0], [1], [0, 0, 1, 1], [], []>} : vector<8x8xbf16>, vector<8x128xbf16>, vector<8x128xf32> -> vector<8x128xf32>
    %53 = vector.extract_strided_slice %49 {offsets = [0, 8], sizes = [8, 8], strides = [1, 1]} : vector<8x24xbf16> to vector<8x8xbf16>
    %54 = vector.extract_strided_slice %48 {offsets = [0, 2], sizes = [8, 128], strides = [1, 1]} : vector<8x132xbf16> to vector<8x128xbf16>
    %cst_20 = arith.constant dense<0.000000e+00> : vector<8x128xf32>
    %55 = tpu.matmul %53, %54, %cst_20 {dimension_numbers = #tpu.dot_dimension_numbers<[1], [0], [0], [1], [0, 0, 1, 1], [], []>} : vector<8x8xbf16>, vector<8x128xbf16>, vector<8x128xf32> -> vector<8x128xf32>
    %56 = arith.addf %52, %55 : vector<8x128xf32>
    %57 = vector.extract_strided_slice %49 {offsets = [0, 16], sizes = [8, 8], strides = [1, 1]} : vector<8x24xbf16> to vector<8x8xbf16>
    %58 = vector.extract_strided_slice %48 {offsets = [0, 4], sizes = [8, 128], strides = [1, 1]} : vector<8x132xbf16> to vector<8x128xbf16>
    %cst_21 = arith.constant dense<0.000000e+00> : vector<8x128xf32>
    %59 = tpu.matmul %57, %58, %cst_21 {dimension_numbers = #tpu.dot_dimension_numbers<[1], [0], [0], [1], [0, 0, 1, 1], [], []>} : vector<8x8xbf16>, vector<8x128xbf16>, vector<8x128xf32> -> vector<8x128xf32>
    %60 = arith.addf %56, %59 : vector<8x128xf32>
    %c0_22 = arith.constant 0 : index
    %c0_23 = arith.constant 0 : index
    %61 = vector.load %arg7[%c0_22, %c0_23] : memref<8x1xf32, #tpu.memory_space<vmem>>, vector<8x1xf32>
    %62 = vector.broadcast %61 : vector<8x1xf32> to vector<8x128xf32>
    %63 = arith.addf %60, %62 : vector<8x128xf32>
    %c0_24 = arith.constant 0 : index
    %c0_25 = arith.constant 0 : index
    %64 = vector.load %arg8[%c0_24, %c0_25] : memref<8x4xbf16, #tpu.memory_space<vmem>>, vector<8x4xbf16>
    %65 = arith.truncf %2 : vector<4x128xf32> to vector<4x128xbf16>
    %cst_26 = arith.constant dense<0.000000e+00> : vector<8x128xf32>
    %66 = tpu.matmul %64, %65, %cst_26 {dimension_numbers = #tpu.dot_dimension_numbers<[1], [0], [0], [1], [0, 0, 1, 1], [], []>} : vector<8x4xbf16>, vector<4x128xbf16>, vector<8x128xf32> -> vector<8x128xf32>
    %c0_27 = arith.constant 0 : index
    %c0_28 = arith.constant 0 : index
    %67 = vector.load %arg9[%c0_27, %c0_28] : memref<8x1xf32, #tpu.memory_space<vmem>>, vector<8x1xf32>
    %68 = vector.broadcast %67 : vector<8x1xf32> to vector<8x128xf32>
    %69 = arith.addf %66, %68 : vector<8x128xf32>
    %70 = arith.addf %63, %69 : vector<8x128xf32>
    %cst_29 = arith.constant 0.000000e+00 : f32
    %71 = vector.broadcast %cst_29 : f32 to vector<8x128xf32>
    %72 = arith.cmpf ogt, %70, %71 : vector<8x128xf32>
    %cst_30 = arith.constant 0.00999999977 : f32
    %73 = vector.broadcast %cst_30 : f32 to vector<8x128xf32>
    %74 = arith.mulf %73, %70 : vector<8x128xf32>
    %75 = arith.select %72, %70, %74 : vector<8x128xi1>, vector<8x128xf32>
    %c0_31 = arith.constant 0 : index
    %c0_32 = arith.constant 0 : index
    %c0_33 = arith.constant 0 : index
    %76 = vector.load %arg10[%c0_31, %c0_32, %c0_33] : memref<1x8x128xf32, #tpu.memory_space<vmem>>, vector<1x8x128xf32>
    %77 = vector.shape_cast %76 : vector<1x8x128xf32> to vector<8x128xf32>
    %78 = vector.shape_cast %75 : vector<8x128xf32> to vector<1x8x128xf32>
    tpu.vector_store %arg10[%c0_31, %c0_32, %c0_33], %78 {strides = array<i32>} : memref<1x8x128xf32, #tpu.memory_space<vmem>>, vector<1x8x128xf32>,
    return
  }
  func.func @transform_0(%arg0: i32, %arg1: i32) -> (i32, i32, i32) {
    %c0_i32 = arith.constant 0 : i32
    %c0_i32_0 = arith.constant 0 : i32
    return %arg0, %c0_i32, %arg1 : i32, i32, i32
  }
  func.func @transform_1(%arg0: i32, %arg1: i32) -> (i32, i32, i32) {
    %c1_i32 = arith.constant 1 : i32
    %0 = arith.muli %arg1, %c1_i32 : i32
    %c1_i32_0 = arith.constant 1 : i32
    %1 = arith.subi %0, %c1_i32_0 : i32
    %c0_i32 = arith.constant 0 : i32
    %2 = arith.maxsi %1, %c0_i32 : i32
    %c0_i32_1 = arith.constant 0 : i32
    %c0_i32_2 = arith.constant 0 : i32
    return %arg0, %c0_i32_1, %2 : i32, i32, i32
  }
  func.func @transform_2(%arg0: i32, %arg1: i32) -> (i32, i32) {
    %c0_i32 = arith.constant 0 : i32
    %c0_i32_0 = arith.constant 0 : i32
    %c0_i32_1 = arith.constant 0 : i32
    return %c0_i32, %c0_i32_0 : i32, i32
  }
  func.func @transform_3(%arg0: i32, %arg1: i32) -> (i32, i32) {
    %c0_i32 = arith.constant 0 : i32
    %c0_i32_0 = arith.constant 0 : i32
    %c0_i32_1 = arith.constant 0 : i32
    return %c0_i32, %c0_i32_0 : i32, i32
  }
  func.func @transform_4(%arg0: i32, %arg1: i32) -> (i32, i32) {
    %c0_i32 = arith.constant 0 : i32
    %c0_i32_0 = arith.constant 0 : i32
    %c0_i32_1 = arith.constant 0 : i32
    return %c0_i32, %c0_i32_0 : i32, i32
  }
  func.func @transform_5(%arg0: i32, %arg1: i32) -> (i32, i32) {
    %c0_i32 = arith.constant 0 : i32
    %c0_i32_0 = arith.constant 0 : i32
    %c0_i32_1 = arith.constant 0 : i32
    return %c0_i32, %c0_i32_0 : i32, i32
  }
  func.func @transform_6(%arg0: i32, %arg1: i32) -> (i32, i32) {
    %c0_i32 = arith.constant 0 : i32
    %c0_i32_0 = arith.constant 0 : i32
    %c0_i32_1 = arith.constant 0 : i32
    return %c0_i32, %c0_i32_0 : i32, i32
  }
  func.func @transform_7(%arg0: i32, %arg1: i32) -> (i32, i32) {
    %c0_i32 = arith.constant 0 : i32
    %c0_i32_0 = arith.constant 0 : i32
    %c0_i32_1 = arith.constant 0 : i32
    return %c0_i32, %c0_i32_0 : i32, i32
  }
  func.func @transform_8(%arg0: i32, %arg1: i32) -> (i32, i32, i32) {
    %c0_i32 = arith.constant 0 : i32
    %c0_i32_0 = arith.constant 0 : i32
    return %arg0, %c0_i32, %arg1 : i32, i32, i32
  }
}

</mosaic_0001>

<llo_original>
// kernel: tpu_custom_call.1
$region0: #{tpu_custom_call.1}
  #allocation0 [shape = 'u32[]', space=smem, size = 0x4, offset = 0x4, fixed_abs, tag = 'smem constant byte address 0x4 - core index']
  #allocation1 [shape = 'u32[72,128]{1,0:T(1,128)}', space=vmem, size = 0x9000, scoped, tag = 'internal scratch']
  %s0 = inlined_call_operand.vmem [shape: f32[2,4,128], index: 0, kind: input, shape index: {}]
  %s1 = inlined_call_operand.vmem [shape: f32[2,4,128], index: 1, kind: input, shape index: {}]
  %s2 = inlined_call_operand.vmem [shape: bf16[8,12], index: 2, kind: input, shape index: {}]
  %s3 = inlined_call_operand.vmem [shape: f32[8,1], index: 3, kind: input, shape index: {}]
  %s4 = inlined_call_operand.vmem [shape: bf16[8,24], index: 4, kind: input, shape index: {}]
  %s5 = inlined_call_operand.vmem [shape: f32[8,1], index: 5, kind: input, shape index: {}]
  %s6 = inlined_call_operand.vmem [shape: bf16[8,4], index: 6, kind: input, shape index: {}]
  %s7 = inlined_call_operand.vmem [shape: f32[8,1], index: 7, kind: input, shape index: {}]
  %s8 = inlined_call_operand.hbm [shape: f32[2,8,128], index: 8, kind: output, shape index: {}]
  %s9 = sld [smem:[#allocation0]]
  $region65: #{tpu_custom_call.1} parent=0
    _
  %s11 = ssub.s32 1, %s9
  %s12 = scalar_select 0, %s11, %s9
  $region1: #{tpu_custom_call.1} parent=0
    #allocation2 [shape = 'u8[8192]{0}', space=vmem, size = 0x2000, scoped, tag = 'output window, operand 0']
    #allocation3 [shape = 's32[2]{0}', space=sflag, size = 0x8, scoped, tag = 'scoped memory for tpu_custom_call.1']
    %13 = vsyncpa [#allocation3], 0
    %s14 = scalar_lea.sflag [#allocation3], 1
    %15 = vsyncpa %s14, 0
    loop: start=0, step=1, limit=4
    $region2: #{tpu_custom_call.1} parent=1 // loop_pre_header
      _
    $region3: #{tpu_custom_call.1} parent=1 // loop_header
      %s17 = sphi 0, %s21
      %p18 = scmp.ge.s32.totalorder %s17, 4
      %s24 = sphi 0, %s36
      %s25 = sphi 0, %s32
      %s26 = sphi 0, %s24
      %s27 = sphi 0, %s25
      %s28 = sphi 0, %s26
      %s29 = sphi 0, %s27
      %s41 = sphi 0, %s43
      %s44 = sphi 0, %s41
      %s45 = sphi 0, %s44
      %s61 = sphi 0, %s45
      %s75 = sphi 0, %s77
      %s78 = sphi 0, %s75
      %s79 = sphi 0, %s78
      %s95 = sphi 0, %s79
      %s99 = sphi 0, %s99
      %s101 = sphi 0, %s99
      %s102 = sphi 0, %s101
      %s116 = sphi 0, %s102
      %s120 = sphi 0, %s120
      %s122 = sphi 0, %s120
      %s123 = sphi 0, %s122
      %s137 = sphi 0, %s123
      %s141 = sphi 0, %s141
      %s143 = sphi 0, %s141
      %s144 = sphi 0, %s143
      %s158 = sphi 0, %s144
      %s162 = sphi 0, %s162
      %s164 = sphi 0, %s162
      %s165 = sphi 0, %s164
      %s179 = sphi 0, %s165
      %s183 = sphi 0, %s183
      %s185 = sphi 0, %s183
      %s186 = sphi 0, %s185
      %s200 = sphi 0, %s186
      %s204 = sphi 0, %s204
      %s206 = sphi 0, %s204
      %s207 = sphi 0, %s206
      %s221 = sphi 0, %s207
      %s229 = sphi 0, %s231
      %s232 = sphi 0, %s229
      %s233 = sphi 0, %s232
      %s249 = sphi 0, %s233
    $region4: #{tpu_custom_call.1} parent=1 // loop_header_branch
      %20 = sbr.rel (%p18) target = $region8
    $region5: #{tpu_custom_call.1} parent=1 // loop_body
      %s22 = ssub.s32 %s17, 1
      %s23 = ssub.s32 %s17, 2
      %s30 = sadd.s32 1, %s25
      %p31 = scmp.ge.s32.totalorder %s30, 1
      %s32 = scalar_select %p31, 0, %s30
      %s33 = sadd.s32 1, %s24
      %s34 = scalar_select %p31, %s33, %s24
      %p35 = scmp.ge.s32.totalorder %s34, 2
      %s36 = scalar_select %p35, 0, %s34
      %s37 = ssub.s32 %s24, %s36
      %s38 = ssub.s32 %s25, %s32
      %s39 = sor.u32 %s37, %s38
      %p40 = scmp.eq.s32.totalorder %s39, 0
      %s42 = sadd.s32 %s41, 1
      %s43 = scalar_select %p40, %s41, %s42
      %p46 = pneg %p40
      %p47 = scmp.eq.s32.totalorder %s17, 1
      %p48 = por %p46, %p47
      %p49 = scmp.ne.s32.totalorder %s41, %s44
      %p50 = scmp.eq.s32.totalorder %s17, 0
      %p51 = por %p49, %p50
      %p52 = scmp.ne.s32.totalorder %s41, %s44
      %p53 = scmp.eq.s32.totalorder %s22, 1
      %p54 = por %p52, %p53
      %p55 = scmp.ne.s32.totalorder %s44, %s45
      %p56 = scmp.eq.s32.totalorder %s22, 0
      %p57 = por %p55, %p56
      %p58 = scmp.ne.s32.totalorder %s44, %s45
      %p59 = scmp.eq.s32.totalorder %s23, 1
      %p60 = por %p58, %p59
      %p62 = scmp.ne.s32.totalorder %s45, %s61
      %p63 = scmp.eq.s32.totalorder %s23, 0
      %p64 = por %p62, %p63
      %s65 = ssub.s32 %s25, 1
      %p66 = scmp.gt.s32.totalorder %s65, 0
      %s67 = scalar_select %p66, %s65, 0
      %s68 = ssub.s32 %s32, 1
      %p69 = scmp.gt.s32.totalorder %s68, 0
      %s70 = scalar_select %p69, %s68, 0
      %s71 = ssub.s32 %s24, %s36
      %s72 = ssub.s32 %s67, %s70
      %s73 = sor.u32 %s71, %s72
      %p74 = scmp.eq.s32.totalorder %s73, 0
      %s76 = sadd.s32 %s75, 1
      %s77 = scalar_select %p74, %s75, %s76
      %p80 = pneg %p74
      %p81 = scmp.eq.s32.totalorder %s17, 1
      %p82 = por %p80, %p81
      %p83 = scmp.ne.s32.totalorder %s75, %s78
      %p84 = scmp.eq.s32.totalorder %s17, 0
      %p85 = por %p83, %p84
      %p86 = scmp.ne.s32.totalorder %s75, %s78
      %p87 = scmp.eq.s32.totalorder %s22, 1
      %p88 = por %p86, %p87
      %p89 = scmp.ne.s32.totalorder %s78, %s79
      %p90 = scmp.eq.s32.totalorder %s22, 0
      %p91 = por %p89, %p90
      %p92 = scmp.ne.s32.totalorder %s78, %s79
      %p93 = scmp.eq.s32.totalorder %s23, 1
      %p94 = por %p92, %p93
      %p96 = scmp.ne.s32.totalorder %s79, %s95
      %p97 = scmp.eq.s32.totalorder %s23, 0
      %p98 = por %p96, %p97
      %s100 = sadd.s32 %s99, 1
      %p103 = scmp.eq.s32.totalorder %s17, 1
      %p104 = scmp.ne.s32.totalorder %s99, %s101
      %p105 = scmp.eq.s32.totalorder %s17, 0
      %p106 = por %p104, %p105
      %p107 = scmp.ne.s32.totalorder %s99, %s101
      %p108 = scmp.eq.s32.totalorder %s22, 1
      %p109 = por %p107, %p108
      %p110 = scmp.ne.s32.totalorder %s101, %s102
      %p111 = scmp.eq.s32.totalorder %s22, 0
      %p112 = por %p110, %p111
      %p113 = scmp.ne.s32.totalorder %s101, %s102
      %p114 = scmp.eq.s32.totalorder %s23, 1
      %p115 = por %p113, %p114
      %p117 = scmp.ne.s32.totalorder %s102, %s116
      %p118 = scmp.eq.s32.totalorder %s23, 0
      %p119 = por %p117, %p118
      %s121 = sadd.s32 %s120, 1
      %p124 = scmp.eq.s32.totalorder %s17, 1
      %p125 = scmp.ne.s32.totalorder %s120, %s122
      %p126 = scmp.eq.s32.totalorder %s17, 0
      %p127 = por %p125, %p126
      %p128 = scmp.ne.s32.totalorder %s120, %s122
      %p129 = scmp.eq.s32.totalorder %s22, 1
      %p130 = por %p128, %p129
      %p131 = scmp.ne.s32.totalorder %s122, %s123
      %p132 = scmp.eq.s32.totalorder %s22, 0
      %p133 = por %p131, %p132
      %p134 = scmp.ne.s32.totalorder %s122, %s123
      %p135 = scmp.eq.s32.totalorder %s23, 1
      %p136 = por %p134, %p135
      %p138 = scmp.ne.s32.totalorder %s123, %s137
      %p139 = scmp.eq.s32.totalorder %s23, 0
      %p140 = por %p138, %p139
      %s142 = sadd.s32 %s141, 1
      %p145 = scmp.eq.s32.totalorder %s17, 1
      %p146 = scmp.ne.s32.totalorder %s141, %s143
      %p147 = scmp.eq.s32.totalorder %s17, 0
      %p148 = por %p146, %p147
      %p149 = scmp.ne.s32.totalorder %s141, %s143
      %p150 = scmp.eq.s32.totalorder %s22, 1
      %p151 = por %p149, %p150
      %p152 = scmp.ne.s32.totalorder %s143, %s144
      %p153 = scmp.eq.s32.totalorder %s22, 0
      %p154 = por %p152, %p153
      %p155 = scmp.ne.s32.totalorder %s143, %s144
      %p156 = scmp.eq.s32.totalorder %s23, 1
      %p157 = por %p155, %p156
      %p159 = scmp.ne.s32.totalorder %s144, %s158
      %p160 = scmp.eq.s32.totalorder %s23, 0
      %p161 = por %p159, %p160
      %s163 = sadd.s32 %s162, 1
      %p166 = scmp.eq.s32.totalorder %s17, 1
      %p167 = scmp.ne.s32.totalorder %s162, %s164
      %p168 = scmp.eq.s32.totalorder %s17, 0
      %p169 = por %p167, %p168
      %p170 = scmp.ne.s32.totalorder %s162, %s164
      %p171 = scmp.eq.s32.totalorder %s22, 1
      %p172 = por %p170, %p171
      %p173 = scmp.ne.s32.totalorder %s164, %s165
      %p174 = scmp.eq.s32.totalorder %s22, 0
      %p175 = por %p173, %p174
      %p176 = scmp.ne.s32.totalorder %s164, %s165
      %p177 = scmp.eq.s32.totalorder %s23, 1
      %p178 = por %p176, %p177
      %p180 = scmp.ne.s32.totalorder %s165, %s179
      %p181 = scmp.eq.s32.totalorder %s23, 0
      %p182 = por %p180, %p181
      %s184 = sadd.s32 %s183, 1
      %p187 = scmp.eq.s32.totalorder %s17, 1
      %p188 = scmp.ne.s32.totalorder %s183, %s185
      %p189 = scmp.eq.s32.totalorder %s17, 0
      %p190 = por %p188, %p189
      %p191 = scmp.ne.s32.totalorder %s183, %s185
      %p192 = scmp.eq.s32.totalorder %s22, 1
      %p193 = por %p191, %p192
      %p194 = scmp.ne.s32.totalorder %s185, %s186
      %p195 = scmp.eq.s32.totalorder %s22, 0
      %p196 = por %p194, %p195
      %p197 = scmp.ne.s32.totalorder %s185, %s186
      %p198 = scmp.eq.s32.totalorder %s23, 1
      %p199 = por %p197, %p198
      %p201 = scmp.ne.s32.totalorder %s186, %s200
      %p202 = scmp.eq.s32.totalorder %s23, 0
      %p203 = por %p201, %p202
      %s205 = sadd.s32 %s204, 1
      %p208 = scmp.eq.s32.totalorder %s17, 1
      %p209 = scmp.ne.s32.totalorder %s204, %s206
      %p210 = scmp.eq.s32.totalorder %s17, 0
      %p211 = por %p209, %p210
      %p212 = scmp.ne.s32.totalorder %s204, %s206
      %p213 = scmp.eq.s32.totalorder %s22, 1
      %p214 = por %p212, %p213
      %p215 = scmp.ne.s32.totalorder %s206, %s207
      %p216 = scmp.eq.s32.totalorder %s22, 0
      %p217 = por %p215, %p216
      %p218 = scmp.ne.s32.totalorder %s206, %s207
      %p219 = scmp.eq.s32.totalorder %s23, 1
      %p220 = por %p218, %p219
      %p222 = scmp.ne.s32.totalorder %s207, %s221
      %p223 = scmp.eq.s32.totalorder %s23, 0
      %p224 = por %p222, %p223
      %s225 = ssub.s32 %s24, %s36
      %s226 = ssub.s32 %s25, %s32
      %s227 = sor.u32 %s225, %s226
      %p228 = scmp.eq.s32.totalorder %s227, 0
      %s230 = sadd.s32 %s229, 1
      %s231 = scalar_select %p228, %s229, %s230
      %p234 = pneg %p228
      %p235 = scmp.eq.s32.totalorder %s17, 1
      %p236 = por %p234, %p235
      %p237 = scmp.ne.s32.totalorder %s229, %s232
      %p238 = scmp.eq.s32.totalorder %s17, 0
      %p239 = por %p237, %p238
      %p240 = scmp.ne.s32.totalorder %s229, %s232
      %p241 = scmp.eq.s32.totalorder %s22, 1
      %p242 = por %p240, %p241
      %p243 = scmp.ne.s32.totalorder %s232, %s233
      %p244 = scmp.eq.s32.totalorder %s22, 0
      %p245 = por %p243, %p244
      %p246 = scmp.ne.s32.totalorder %s232, %s233
      %p247 = scmp.eq.s32.totalorder %s23, 1
      %p248 = por %p246, %p247
      %p250 = scmp.ne.s32.totalorder %s233, %s249
      %p251 = scmp.eq.s32.totalorder %s23, 0
      %p252 = por %p250, %p251
      %p253 = scmp.le.s32.totalorder 1, %s17
      %p254 = scmp.lt.s32.totalorder %s17, 3
      %p255 = pnand %p253, %p254
      %p256 = pneg %p255
      // Predicated region
      $region9: #{tpu_custom_call.1} parent=5 // pred_check
        _
      $region10: #{tpu_custom_call.1} parent=5 // pred_check_branch
        %258 = sbr.rel (%p255) target = $region12
      $region11: #{tpu_custom_call.1} parent=5 // pred_region
        %s259 = ssub.s32 %s17, 1
        // Predicated region
        $region13: #{tpu_custom_call.1} parent=11 // pred_check
          %p260 = pneg %p112
        $region14: #{tpu_custom_call.1} parent=11 // pred_check_branch
          %262 = sbr.rel (%p260) target = $region16
        $region15: #{tpu_custom_call.1} parent=11 // pred_region
          _
        $region16: #{tpu_custom_call.1} parent=11 // pred_fallthru
          _
        // Predicated region
        $region17: #{tpu_custom_call.1} parent=11 // pred_check
          %p263 = pneg %p133
        $region18: #{tpu_custom_call.1} parent=11 // pred_check_branch
          %265 = sbr.rel (%p263) target = $region20
        $region19: #{tpu_custom_call.1} parent=11 // pred_region
          _
        $region20: #{tpu_custom_call.1} parent=11 // pred_fallthru
          _
        // Predicated region
        $region21: #{tpu_custom_call.1} parent=11 // pred_check
          %p266 = pneg %p154
        $region22: #{tpu_custom_call.1} parent=11 // pred_check_branch
          %268 = sbr.rel (%p266) target = $region24
        $region23: #{tpu_custom_call.1} parent=11 // pred_region
          _
        $region24: #{tpu_custom_call.1} parent=11 // pred_fallthru
          _
        // Predicated region
        $region25: #{tpu_custom_call.1} parent=11 // pred_check
          %p269 = pneg %p175
        $region26: #{tpu_custom_call.1} parent=11 // pred_check_branch
          %271 = sbr.rel (%p269) target = $region28
        $region27: #{tpu_custom_call.1} parent=11 // pred_region
          _
        $region28: #{tpu_custom_call.1} parent=11 // pred_fallthru
          _
        // Predicated region
        $region29: #{tpu_custom_call.1} parent=11 // pred_check
          %p272 = pneg %p196
        $region30: #{tpu_custom_call.1} parent=11 // pred_check_branch
          %274 = sbr.rel (%p272) target = $region32
        $region31: #{tpu_custom_call.1} parent=11 // pred_region
          _
        $region32: #{tpu_custom_call.1} parent=11 // pred_fallthru
          _
        // Predicated region
        $region33: #{tpu_custom_call.1} parent=11 // pred_check
          %p275 = pneg %p217
        $region34: #{tpu_custom_call.1} parent=11 // pred_check_branch
          %277 = sbr.rel (%p275) target = $region36
        $region35: #{tpu_custom_call.1} parent=11 // pred_region
          _
        $region36: #{tpu_custom_call.1} parent=11 // pred_fallthru
          _
      $region12: #{tpu_custom_call.1} parent=5 // pred_fallthru
        _
      %p278 = scmp.lt.s32.totalorder %s17, 2
      // Predicated region
      $region37: #{tpu_custom_call.1} parent=5 // pred_check
        %p279 = pneg %p278
      $region38: #{tpu_custom_call.1} parent=5 // pred_check_branch
        %281 = sbr.rel (%p279) target = $region40
      $region39: #{tpu_custom_call.1} parent=5 // pred_region
        // Predicated region
        $region41: #{tpu_custom_call.1} parent=39 // pred_check
          %p282 = pneg %p51
        $region42: #{tpu_custom_call.1} parent=39 // pred_check_branch
          %284 = sbr.rel (%p282) target = $region44
        $region43: #{tpu_custom_call.1} parent=39 // pred_region
          %p285 = scmp.lt.s32.totalorder %s24, 1
          %s286 = scalar_select %p285, %s24, 1
          %p287 = scmp.lt.s32.totalorder %s25, 0
          %s288 = scalar_select %p287, %s25, 0
          %s289 = sadd.s32 %s288, %s286
          %s290 = smul.addr %s289, 4
          %s291 = scalar_lea.vmem %s0, %s290
        $region44: #{tpu_custom_call.1} parent=39 // pred_fallthru
          _
        // Predicated region
        $region45: #{tpu_custom_call.1} parent=39 // pred_check
          %p292 = pneg %p85
        $region46: #{tpu_custom_call.1} parent=39 // pred_check_branch
          %294 = sbr.rel (%p292) target = $region48
        $region47: #{tpu_custom_call.1} parent=39 // pred_region
          %s295 = ssub.s32 %s25, 1
          %p296 = scmp.gt.s32.totalorder %s295, 0
          %s297 = scalar_select %p296, %s295, 0
          %p298 = scmp.lt.s32.totalorder %s24, 1
          %s299 = scalar_select %p298, %s24, 1
          %p300 = scmp.lt.s32.totalorder %s297, 0
          %s301 = scalar_select %p300, %s297, 0
          %s302 = sadd.s32 %s301, %s299
          %s303 = smul.addr %s302, 4
          %s304 = scalar_lea.vmem %s1, %s303
          %s305 = ssub.s32 %s25, 1
          %p306 = scmp.gt.s32.totalorder %s305, 0
          %s307 = scalar_select %p306, %s305, 0
        $region48: #{tpu_custom_call.1} parent=39 // pred_fallthru
          _
      $region40: #{tpu_custom_call.1} parent=5 // pred_fallthru
        _
      %p308 = scmp.le.s32.totalorder 1, %s17
      %p309 = scmp.lt.s32.totalorder %s17, 3
      %p310 = pnand %p308, %p309
      %p311 = pneg %p310
      // Predicated region
      $region49: #{tpu_custom_call.1} parent=5 // pred_check
        _
      $region50: #{tpu_custom_call.1} parent=5 // pred_check_branch
        %313 = sbr.rel (%p310) target = $region52
      $region51: #{tpu_custom_call.1} parent=5 // pred_region
        %s314 = ssub.s32 %s17, 1
        %p315 = scmp.lt.s32.totalorder %s26, 1
        %s316 = scalar_select %p315, %s26, 1
        %p317 = scmp.lt.s32.totalorder %s27, 0
        %s318 = scalar_select %p317, %s27, 0
        %s319 = sadd.s32 %s318, %s316
        %s320 = smul.addr %s319, 4
        %s321 = scalar_lea.vmem %s0, %s320
        %p322 = pneg %p57
        %p323 = pneg %p54
        %s324 = ssub.s32 %s27, 1
        %p325 = scmp.gt.s32.totalorder %s324, 0
        %s326 = scalar_select %p325, %s324, 0
        %p327 = scmp.lt.s32.totalorder %s26, 1
        %s328 = scalar_select %p327, %s26, 1
        %p329 = scmp.lt.s32.totalorder %s326, 0
        %s330 = scalar_select %p329, %s326, 0
        %s331 = sadd.s32 %s330, %s328
        %s332 = smul.addr %s331, 4
        %s333 = scalar_lea.vmem %s1, %s332
        %p334 = pneg %p91
        %p335 = pneg %p88
        %p336 = pneg %p112
        %p337 = pneg %p109
        %p338 = pneg %p133
        %p339 = pneg %p130
        %p340 = pneg %p154
        %p341 = pneg %p151
        %p342 = pneg %p175
        %p343 = pneg %p172
        %p344 = pneg %p196
        %p345 = pneg %p193
        %p346 = pneg %p217
        %p347 = pneg %p214
        %p348 = pneg %p245
        %p349 = pneg %p242
        %s350 = sand.u32 %s232, 1
        %s351 = scalar_lea.sflag [#allocation3], %s350
        %s352 = sand.u32 %s232, 1
        %s353 = smul.addr %s352, 8
        %s354 = scalar_lea.vmem [#allocation2], %s353
        %p355 = scmp.lt.s32.totalorder %s26, 1
        %s356 = scalar_select %p355, %s26, 1
        %p357 = scmp.lt.s32.totalorder %s27, 0
        %s358 = scalar_select %p357, %s27, 0
        %s359 = sadd.s32 %s358, %s356
        %s360 = smul.addr %s359, 4
        %s361 = scalar_lea.vmem %s0, %s360
        %s362 = ssub.s32 %s27, 1
        %p363 = scmp.gt.s32.totalorder %s362, 0
        %s364 = scalar_select %p363, %s362, 0
        %p365 = scmp.lt.s32.totalorder %s26, 1
        %s366 = scalar_select %p365, %s26, 1
        %p367 = scmp.lt.s32.totalorder %s364, 0
        %s368 = scalar_select %p367, %s364, 0
        %s369 = sadd.s32 %s368, %s366
        %s370 = smul.addr %s369, 4
        %s371 = scalar_lea.vmem %s1, %s370
        %s372 = ssub.s32 %s27, 1
        %p373 = scmp.gt.s32.totalorder %s372, 0
        %s374 = scalar_select %p373, %s372, 0
        %s376 = smul.u32 %s27, 128
        %v377 = vld [vmem:[%s361] sm:$0xf]
        %v378 = vld [vmem:[%s371] sm:$0xf]
        %v379 = vlaneseq
        %v380 = vand.u32 %v379, 127
        %s381 = ssub.s32 %s376, 128
        %v382 = vstv %s381
        %v383 = vadd.s32 %v382, %v380
        %vm384 = vcmp.ge.s32.totalorder %v383, 0
        %v385 = vsel %vm384, 1, 0
        %vm386 = vcmp.eq.s32.totalorder %v385, 1
        %v387 = vsel %vm386, %v378, 0.0
        %v388 = vpack.c.bf16 %v387, %v387
        %v389 = vpack.c.bf16 %v377, %v377
        %v390 = vld [vmem:[%s2] sm:$0xf]
        %v392 = vunpack.c.l.b16 %v390
        %v393 = vpack.c.b16 %v392, %v392
        %394 = vrot.lane.b32.xlu0 %v393, 124
        %v395 = vpop.permute.xlu0 %394
        %398 = vrot.lane.b32.xlu0 %v388, 6
        %v399 = vpop.permute.xlu0 %398
        %400 = vrot.lane.b32.xlu0 %v389, 6
        %v401 = vpop.permute.xlu0 %400
        %vm402 = vcmask 48128
        %v403 = vsel %vm402, %v399, %v401
        %vm404 = vcmask 31744
        %v406 = vsel %vm404, %v395, 0
        %vm408 = vcmask 1041408
        %v410 = vsel %vm408, %v403, 0
        %v413 = vsel %vm408, %v401, 0
        %415 = vmatpush.bf16.msra.mxu0 0
        %416 = vmatpush.bf16.msra.mxu0 0
        %417 = vmatpush.bf16.msra.mxu0 0
        %418 = vmatpush.bf16.msra.mxu0 0
        %419 = vmatpush.bf16.msra.mxu0 0
        %420 = vmatpush.bf16.msra.mxu0 0
        %421 = vmatpush.bf16.msra.mxu0 0
        %422 = vmatpush.bf16.msra.mxu0 %v410
        %423 = vmatmul.bf16.gmra.mxu0 %v406
        %v424 = vpop.f32.mrf.mxu0
        %v425 = vadd.f32 0.0, %v424
        %v426 = vpop.f32.mrf.mxu0
        %427 = vdwg.mxu0
        %428 = vmatpush.bf16.msra.mxu0 0
        %429 = vmatpush.bf16.msra.mxu0 0
        %430 = vmatpush.bf16.msra.mxu0 0
        %431 = vmatpush.bf16.msra.mxu0 0
        %432 = vmatpush.bf16.msra.mxu0 0
        %433 = vmatpush.bf16.msra.mxu0 0
        %434 = vmatpush.bf16.msra.mxu0 0
        %435 = vmatpush.bf16.msra.mxu0 %v413
        %436 = vmatmul.bf16.gmra.mxu0 %v406
        %v437 = vpop.f32.mrf.mxu0
        %v438 = vadd.f32 0.0, %v437
        %v439 = vpop.f32.mrf.mxu0
        %440 = vdwg.mxu0
        %441 = vrot.lane.b32.xlu0 %v388, 8
        %v442 = vpop.permute.xlu0 %441
        %443 = vrot.lane.b32.xlu0 %v389, 8
        %v444 = vpop.permute.xlu0 %443
        %vm445 = vcmask 64512
        %v446 = vsel %vm445, %v442, %v444
        %v448 = vsel %vm404, %v390, 0
        %v451 = vsel %vm408, %v446, 0
        %v454 = vsel %vm408, %v444, 0
        %456 = vmatpush.bf16.msra.mxu0 0
        %457 = vmatpush.bf16.msra.mxu0 0
        %458 = vmatpush.bf16.msra.mxu0 0
        %459 = vmatpush.bf16.msra.mxu0 0
        %460 = vmatpush.bf16.msra.mxu0 0
        %461 = vmatpush.bf16.msra.mxu0 0
        %462 = vmatpush.bf16.msra.mxu0 0
        %463 = vmatpush.bf16.msra.mxu0 %v451
        %464 = vmatmul.bf16.gmra.mxu0 %v448
        %v465 = vpop.f32.mrf.mxu0
        %v466 = vadd.f32 %v425, %v465
        %v467 = vpop.f32.mrf.mxu0
        %468 = vdwg.mxu0
        %469 = vmatpush.bf16.msra.mxu0 0
        %470 = vmatpush.bf16.msra.mxu0 0
        %471 = vmatpush.bf16.msra.mxu0 0
        %472 = vmatpush.bf16.msra.mxu0 0
        %473 = vmatpush.bf16.msra.mxu0 0
        %474 = vmatpush.bf16.msra.mxu0 0
        %475 = vmatpush.bf16.msra.mxu0 0
        %476 = vmatpush.bf16.msra.mxu0 %v454
        %477 = vmatmul.bf16.gmra.mxu0 %v448
        %v478 = vpop.f32.mrf.mxu0
        %v479 = vadd.f32 %v438, %v478
        %v480 = vpop.f32.mrf.mxu0
        %481 = vdwg.mxu0
        %482 = vrot.lane.b32.xlu0 %v393, 120
        %v483 = vpop.permute.xlu0 %482
        %484 = vrot.lane.b32.xlu0 %v388, 4
        %v485 = vpop.permute.xlu0 %484
        %486 = vrot.lane.b32.xlu0 %v389, 4
        %v487 = vpop.permute.xlu0 %486
        %vm488 = vcmask 31744
        %v489 = vsel %vm488, %v485, %v487
        %v491 = vsel %vm404, %v483, 0
        %v494 = vsel %vm408, %v489, 0
        %v497 = vsel %vm408, %v487, 0
        %499 = vmatpush.bf16.msra.mxu0 0
        %500 = vmatpush.bf16.msra.mxu0 0
        %501 = vmatpush.bf16.msra.mxu0 0
        %502 = vmatpush.bf16.msra.mxu0 0
        %503 = vmatpush.bf16.msra.mxu0 0
        %504 = vmatpush.bf16.msra.mxu0 0
        %505 = vmatpush.bf16.msra.mxu0 0
        %506 = vmatpush.bf16.msra.mxu0 %v494
        %507 = vmatmul.bf16.gmra.mxu0 %v491
        %v508 = vpop.f32.mrf.mxu0
        %v509 = vadd.f32 0.0, %v508
        %v510 = vpop.f32.mrf.mxu0
        %511 = vdwg.mxu0
        %512 = vmatpush.bf16.msra.mxu0 0
        %513 = vmatpush.bf16.msra.mxu0 0
        %514 = vmatpush.bf16.msra.mxu0 0
        %515 = vmatpush.bf16.msra.mxu0 0
        %516 = vmatpush.bf16.msra.mxu0 0
        %517 = vmatpush.bf16.msra.mxu0 0
        %518 = vmatpush.bf16.msra.mxu0 0
        %519 = vmatpush.bf16.msra.mxu0 %v497
        %520 = vmatmul.bf16.gmra.mxu0 %v491
        %v521 = vpop.f32.mrf.mxu0
        %v522 = vadd.f32 0.0, %v521
        %v523 = vpop.f32.mrf.mxu0
        %524 = vdwg.mxu0
        %v525 = vadd.f32 %v466, %v509
        %v526 = vadd.f32 %v479, %v522
        %v527 = vld [vmem:[%s3] sm:$0xff]
        %529 = vset.pattern.permute.xlu0 0
        %530 = vperm.xlu0 %529, %v527
        %v531 = vpop.permute.xlu0 %530
        %v533 = vadd.f32 %v525, %v531
        %v534 = vadd.f32 %v526, %v531
        %vm535 = vcmp.gt.f32.partialorder %v533, 0.0
        %vm536 = vcmp.gt.f32.partialorder %v534, 0.0
        %v537 = vmul.f32 %v533, 0.01
        %v538 = vmul.f32 %v534, 0.01
        %v539 = vsel %vm535, %v533, %v537
        %v540 = vsel %vm536, %v534, %v538
        %v541 = vadd.s32 %v380, 128
        %s542 = ssub.s32 %s376, 4
        %v543 = vstv %s542
        %v544 = vadd.s32 %v543, %v380
        %v545 = vadd.s32 %v543, %v541
        %vm546 = vcmp.ge.s32.totalorder %v544, 0
        %vm547 = vcmp.ge.s32.totalorder %v545, 0
        %v548 = vsel %vm546, 1, 0
        %v549 = vsel %vm547, 1, 0
        %vm550 = vcmp.eq.s32.totalorder %v548, 1
        %vm551 = vcmp.eq.s32.totalorder %v549, 1
        %v552 = vsel %vm550, %v539, 0.0
        %v553 = vsel %vm551, %v540, 0.0
        %v554 = vpack.c.bf16 %v553, %v552
        %v555 = vld [vmem:[%s4] sm:$0xf]
        %v557 = vunpack.c.l.b16 %v555
        %v558 = vpack.c.b16 %v557, %v557
        %559 = vrot.lane.b32.xlu0 %v558, 120
        %v560 = vpop.permute.xlu0 %559
        %v562 = vunpack.c.l.b16 %v554
        %v563 = vunpack.c.h.b16 %v554
        %v564 = vpack.c.b16 %v562, %v562
        %v565 = vpack.c.b16 %v563, %v563
        %566 = vrot.lane.b32.xlu0 %v564, 126
        %v567 = vpop.permute.xlu0 %566
        %568 = vrot.lane.b32.xlu0 %v565, 126
        %v569 = vpop.permute.xlu0 %568
        %vm570 = vcmask 1031168
        %v571 = vsel %vm570, %v567, %v569
        %vm572 = vcmask 64512
        %v574 = vsel %vm572, %v560, 0
        %vm576 = vcmask 1043456
        %v578 = vsel %vm576, %v571, 0
        %580 = vmatpush.bf16.msra.mxu0 0
        %581 = vmatpush.bf16.msra.mxu0 0
        %582 = vmatpush.bf16.msra.mxu0 0
        %583 = vmatpush.bf16.msra.mxu0 0
        %584 = vmatpush.bf16.msra.mxu0 0
        %585 = vmatpush.bf16.msra.mxu0 0
        %586 = vmatpush.bf16.msra.mxu0 0
        %587 = vmatpush.bf16.msra.mxu0 %v578
        %588 = vmatmul.bf16.gmra.mxu0 %v574
        %v589 = vpop.f32.mrf.mxu0
        %v590 = vadd.f32 0.0, %v589
        %v591 = vpop.f32.mrf.mxu0
        %592 = vdwg.mxu0
        %v594 = vsel %vm572, %v555, 0
        %v597 = vsel %vm576, %v554, 0
        %599 = vmatpush.bf16.msra.mxu0 0
        %600 = vmatpush.bf16.msra.mxu0 0
        %601 = vmatpush.bf16.msra.mxu0 0
        %602 = vmatpush.bf16.msra.mxu0 0
        %603 = vmatpush.bf16.msra.mxu0 0
        %604 = vmatpush.bf16.msra.mxu0 0
        %605 = vmatpush.bf16.msra.mxu0 0
        %606 = vmatpush.bf16.msra.mxu0 %v597
        %607 = vmatmul.bf16.gmra.mxu0 %v594
        %v608 = vpop.f32.mrf.mxu0
        %v609 = vadd.f32 %v590, %v608
        %v610 = vpop.f32.mrf.mxu0
        %611 = vdwg.mxu0
        %612 = vrot.lane.b32.xlu0 %v558, 112
        %v613 = vpop.permute.xlu0 %612
        %614 = vrot.lane.b32.xlu0 %v564, 124
        %v615 = vpop.permute.xlu0 %614
        %616 = vrot.lane.b32.xlu0 %v565, 124
        %v617 = vpop.permute.xlu0 %616
        %vm618 = vcmask 1014784
        %v619 = vsel %vm618, %v615, %v617
        %v621 = vsel %vm572, %v613, 0
        %v624 = vsel %vm576, %v619, 0
        %626 = vmatpush.bf16.msra.mxu0 0
        %627 = vmatpush.bf16.msra.mxu0 0
        %628 = vmatpush.bf16.msra.mxu0 0
        %629 = vmatpush.bf16.msra.mxu0 0
        %630 = vmatpush.bf16.msra.mxu0 0
        %631 = vmatpush.bf16.msra.mxu0 0
        %632 = vmatpush.bf16.msra.mxu0 0
        %633 = vmatpush.bf16.msra.mxu0 %v624
        %634 = vmatmul.bf16.gmra.mxu0 %v621
        %v635 = vpop.f32.mrf.mxu0
        %v636 = vadd.f32 0.0, %v635
        %v637 = vpop.f32.mrf.mxu0
        %638 = vdwg.mxu0
        %v639 = vadd.f32 %v609, %v636
        %v640 = vld [vmem:[%s5] sm:$0xff]
        %642 = vset.pattern.permute.xlu0 0
        %643 = vperm.xlu0 %642, %v640
        %v644 = vpop.permute.xlu0 %643
        %v646 = vadd.f32 %v639, %v644
        %v647 = vld [vmem:[%s6] sm:$0xf]
        %v648 = vld [vmem:[%s7] sm:$0xff]
        %650 = vset.pattern.permute.xlu0 0
        %651 = vperm.xlu0 %650, %v648
        %v652 = vpop.permute.xlu0 %651
        %v655 = vsel %vm404, %v647, 0
        %v658 = vsel %vm408, %v389, 0
        %660 = vmatpush.bf16.msra.mxu0 0
        %661 = vmatpush.bf16.msra.mxu0 0
        %662 = vmatpush.bf16.msra.mxu0 0
        %663 = vmatpush.bf16.msra.mxu0 0
        %664 = vmatpush.bf16.msra.mxu0 0
        %665 = vmatpush.bf16.msra.mxu0 0
        %666 = vmatpush.bf16.msra.mxu0 0
        %667 = vmatpush.bf16.msra.mxu0 %v658
        %668 = vmatmul.bf16.gmra.mxu0 %v655
        %v669 = vpop.f32.mrf.mxu0
        %v670 = vadd.f32 %v652, %v669
        %v671 = vpop.f32.mrf.mxu0
        %672 = vdwg.mxu0
        %v673 = vadd.f32 %v646, %v670
        %vm674 = vcmp.gt.f32.partialorder %v673, 0.0
        %v675 = vmul.f32 %v673, 0.01
        %v676 = vsel %vm674, %v673, %v675
        %677 = vst [vmem:[%s354] sm:$0xff] %v676
        %s678 = sand.u32 %s232, 1
        %s679 = scalar_lea.sflag [#allocation3], %s678
        %s680 = sand.u32 %s232, 1
        %s681 = smul.addr %s680, 8
        %s682 = scalar_lea.vmem [#allocation2], %s681
        // Predicated region
        $region53: #{tpu_custom_call.1} parent=51 // pred_check
          %p683 = pneg %p242
        $region54: #{tpu_custom_call.1} parent=51 // pred_check_branch
          %685 = sbr.rel (%p683) target = $region56
        $region55: #{tpu_custom_call.1} parent=51 // pred_region
          %687 = vsyncadd %s679, 0
          %s688 = sadd.s32 %s27, %s26
          %s689 = smul.addr %s688, 8
          %s690 = scalar_lea.hbm %s8, %s689
          %s692 = sshll.u32 %s682, 4
          %s693 = int_to_ptr.vmem [resolvable:$true] %s692
          %s694 = sshll.u32 %s690, 4
          %s695 = int_to_ptr.hbm [resolvable:$true] %s694
          %697 = dma.vmem_to_hbm [thread:$0]  %s693, 128, %s695, %s679
        $region56: #{tpu_custom_call.1} parent=51 // pred_fallthru
          _
      $region52: #{tpu_custom_call.1} parent=5 // pred_fallthru
        _
      %p698 = scmp.le.s32.totalorder 2, %s17
      // Predicated region
      $region57: #{tpu_custom_call.1} parent=5 // pred_check
        %p699 = pneg %p698
      $region58: #{tpu_custom_call.1} parent=5 // pred_check_branch
        %701 = sbr.rel (%p699) target = $region60
      $region59: #{tpu_custom_call.1} parent=5 // pred_region
        %s702 = ssub.s32 %s17, 2
        // Predicated region
        $region61: #{tpu_custom_call.1} parent=59 // pred_check
          %p703 = pneg %p248
        $region62: #{tpu_custom_call.1} parent=59 // pred_check_branch
          %705 = sbr.rel (%p703) target = $region64
        $region63: #{tpu_custom_call.1} parent=59 // pred_region
          %s706 = sand.u32 %s233, 1
          %s707 = scalar_lea.sflag [#allocation3], %s706
          %s708 = sand.u32 %s233, 1
          %s709 = smul.addr %s708, 8
          %s710 = scalar_lea.vmem [#allocation2], %s709
          %712 = dma.done %s707, 128
        $region64: #{tpu_custom_call.1} parent=59 // pred_fallthru
          _
      $region60: #{tpu_custom_call.1} parent=5 // pred_fallthru
        _
    $region6: #{tpu_custom_call.1} parent=1 // loop_footer
      %s21 = sadd.s32 1, %s17
    $region7: #{tpu_custom_call.1} parent=1 // loop_footer_branch
      %16 = sbr.rel target = $region3
    $region8: #{tpu_custom_call.1} parent=1 // loop_exit
      _
    %713 = vsyncpa [#allocation3], 1
    %s714 = scalar_lea.sflag [#allocation3], 1
    %715 = vsyncpa %s714, 1

</llo_original>
